<compile_context>
chip_gen: v7x
topology: tpu7x:2x2x1
jax: 0.10.0
libtpu: 0.0.40
codegen_flags: <defaults>
</compile_context>

<pallas_src>
import functools

import jax
import jax.numpy as jnp
from jax import lax
from jax.experimental import pallas as pl
from jax.experimental.pallas import tpu as pltpu


# ----------------------------------------------------------------------------
# Kernel
# ----------------------------------------------------------------------------
def _upsample_phase_kernel(x_ref, xh_ref, w_ref, b_ref, o_ref):
    """Phase-decomposed ConvTranspose2d(k=3, s=2, p=1, op=1) on one row tile.

    x_ref : (1, th, W, Cin)       main input rows [t*th, (t+1)*th)
    xh_ref: (1, 1,  W, Cin)       halo row (t+1)*th (clamped; zeroed on last tile)
    w_ref : (4*Cin, 4*Cout)       fused packed weights, columns ordered (py, px, co)
    b_ref : (1, 4*Cout)           bias replicated over the 4 output phases (f32)
    o_ref : (1, th, 2, W, 2*Cout) output tile; dim 2 is the y-parity, the last
                                  dim packs (x-parity, Cout) -> lane-dense store
    """
    th = o_ref.shape[1]
    W = o_ref.shape[3]
    co2 = o_ref.shape[4]                      # 2 * Cout
    cin = x_ref.shape[3]

    t = pl.program_id(1)
    is_last = t == pl.num_programs(1) - 1

    xm = x_ref[0]                             # (th, W, Cin)
    xh = xh_ref[0]                            # (1, W, Cin)
    # The last tile's halo row is the (nonexistent) input row H -> zeros
    # (this is the output_padding edge).  Scalar mask keeps lowering trivial.
    keep = jnp.where(is_last, 0.0, 1.0).astype(xh.dtype)
    xh = xh * keep

    # Extend by one halo row below and one zero column on the right (VMEM-only,
    # no wrapper pad / gather).
    x_rows = jnp.concatenate([xm, xh], axis=0)                  # (th+1, W, Cin)
    zero_col = jnp.zeros((th + 1, 1, cin), xm.dtype)
    x_ext = jnp.concatenate([x_rows, zero_col], axis=1)         # (th+1, W+1, Cin)

    # The four input taps feeding one 2x2 output cell.
    a00 = x_ext[:th, :W, :]
    a01 = x_ext[:th, 1:, :]
    a10 = x_ext[1:, :W, :]
    a11 = x_ext[1:, 1:, :]

    # Single fused MXU contraction over all four taps and all four output
    # phases: K = 4*Cin, N = 4*Cout (fills the 256-wide v6e/v7x MXU when
    # 2*Cout < 256).  On v5e's 128-deep MXU, four accumulating K=Cin dots
    # straight from a00..a11 would avoid this lane concatenate.
    xo = jnp.concatenate([a00, a01, a10, a11], axis=-1)         # (th, W, 4*Cin)
    xo = xo.reshape(th * W, 4 * cin)
    acc = jnp.dot(xo, w_ref[...], preferred_element_type=jnp.float32)
    acc = acc + b_ref[...]                                      # (th*W, 4*Cout) f32
    acc = acc.reshape(th, W, 2 * co2)

    # Columns [0, 2*Cout) are the even output rows, [2*Cout, 4*Cout) the odd.
    o_ref[0, :, 0, :, :] = acc[:, :, :co2].astype(o_ref.dtype)
    o_ref[0, :, 1, :, :] = acc[:, :, co2:].astype(o_ref.dtype)


# ----------------------------------------------------------------------------
# Init-time weight packing (hoisted out of the forward pass)
# ----------------------------------------------------------------------------
def pack_upsample_weights(weight, bias, compute_dtype=jnp.bfloat16):
    """Pack PyTorch ConvTranspose2d weights (Cin, Cout, 3, 3) for the kernel.

    ConvTranspose2d(s=2, p=1, k=3): output (oy, ox) receives input (iy, ix)
    with oy = 2*iy - 1 + ky.  Hence oy = 2m needs ky=1 (iy=m); oy = 2m+1 needs
    ky=2 (iy=m) or ky=0 (iy=m+1); identically in x.  Packed rows are the taps
    (a00, a01, a10, a11) = x[m+dy, c+dx]; packed columns are ordered (py, px, co).
    """
    Cin, Cout, K, K2 = weight.shape
    assert (K, K2) == (3, 3), "kernel specializes kernel_size=3"
    z = jnp.zeros((Cin, Cout), weight.dtype)
    t = lambda ky, kx: weight[:, :, ky, kx]
    w_fused = jnp.concatenate([
        jnp.concatenate([t(1, 1), t(1, 2), t(2, 1), t(2, 2)], axis=1),  # a00
        jnp.concatenate([z,       t(1, 0), z,       t(2, 0)], axis=1),  # a01
        jnp.concatenate([z,       z,       t(0, 1), t(0, 2)], axis=1),  # a10
        jnp.concatenate([z,       z,       z,       t(0, 0)], axis=1),  # a11
    ], axis=0).astype(compute_dtype)                                    # (4Cin, 4Cout)
    b4 = jnp.tile(bias.astype(jnp.float32), 4).reshape(1, 4 * Cout)
    return w_fused, b4


# ----------------------------------------------------------------------------
# VMEM-aware tile selection
# ----------------------------------------------------------------------------
def _vmem_bytes_per_step(tile_h, W, Cin, Cout, dbytes):
    inp = 2 * (tile_h + 1) * W * Cin * dbytes                 # main + halo, 2-buffered
    wgt = 2 * (4 * Cin) * (4 * Cout) * dbytes + 2 * 4 * Cout * 4
    out = 2 * tile_h * 2 * W * (2 * Cout) * dbytes            # output, 2-buffered
    tmp = ((tile_h + 1) * (W + 1) * Cin + tile_h * W * 4 * Cin) * dbytes
    acc = tile_h * W * 4 * Cout * 4                           # f32 accumulator
    return inp + wgt + out + tmp + acc


def _pick_tile_h(N, H, W, Cin, Cout, dbytes, vmem_budget=12 * 1024 * 1024):
    """Largest row tile under the VMEM budget, preferring >= 8 grid steps so
    both v7x TensorCores get work and the pipeline has depth."""
    divisors = sorted((d for d in range(1, H + 1) if H % d == 0), reverse=True)
    fits = [d for d in divisors
            if _vmem_bytes_per_step(d, W, Cin, Cout, dbytes) <= vmem_budget]
    if not fits:
        fits = [1]
    for min_steps in (8, 4, 2, 1):
        for d in fits:                                        # descending
            if N * (H // d) >= min_steps:
                return d
    return fits[-1]


# ----------------------------------------------------------------------------
# NHWC-native forward (production path: no boundary transposes)
# ----------------------------------------------------------------------------
@functools.partial(jax.jit, static_argnames=("tile_h",))
def upsample_nhwc(x, w_fused, b4, *, tile_h=None):
    """Forward of the ResUnet `Upsample` (ConvTranspose2d k=3, s=2, p=1, op=1).

    x       : (N, H, W, Cin)      activations (bf16 recommended)
    w_fused : (4*Cin, 4*Cout)     from pack_upsample_weights (same dtype as x)
    b4      : (1, 4*Cout) float32
    returns : (N, 2H, 2W, Cout)   in x.dtype
    """
    N, H, W, Cin = x.shape
    K4, Cout4 = w_fused.shape
    if K4 != 4 * Cin or Cout4 % 4:
        raise ValueError("w_fused must be (4*Cin, 4*Cout) from pack_upsample_weights")
    Cout = Cout4 // 4
    dbytes = jnp.dtype(x.dtype).itemsize

    if tile_h is None:
        tile_h = _pick_tile_h(N, H, W, Cin, Cout, dbytes)
    if H % tile_h:
        raise ValueError(f"tile_h={tile_h} must divide H={H}")
    n_t = H // tile_h

    vmem_limit = int(min(48 * 1024 * 1024,
                         max(32 * 1024 * 1024,
                             2 * _vmem_bytes_per_step(tile_h, W, Cin, Cout, dbytes))))

    out5 = pl.pallas_call(
        _upsample_phase_kernel,
        out_shape=jax.ShapeDtypeStruct((N, H, 2, W, 2 * Cout), x.dtype),
        grid_spec=pltpu.PrefetchScalarGridSpec(
            num_scalar_prefetch=0,
            grid=(N, n_t),
            in_specs=[
                # Main rows of the tile.
                pl.BlockSpec((1, tile_h, W, Cin), lambda n, t: (n, t, 0, 0)),
                # One-row halo below the tile, read from the SAME array (no
                # wrapper gather / pad).  Clamped on the last tile; the kernel
                # zeroes it there (output_padding edge).
                pl.BlockSpec((1, 1, W, Cin),
                             lambda n, t: (n, jnp.minimum((t + 1) * tile_h, H - 1),
                                           0, 0)),
                # Packed weights / bias stay resident across the grid.
                pl.BlockSpec((4 * Cin, 4 * Cout), lambda n, t: (0, 0)),
                pl.BlockSpec((1, 4 * Cout), lambda n, t: (0, 0)),
            ],
            out_specs=pl.BlockSpec((1, tile_h, 2, W, 2 * Cout),
                                   lambda n, t: (n, t, 0, 0, 0)),
        ),
        compiler_params=pltpu.CompilerParams(
            dimension_semantics=("parallel", "parallel"),
            vmem_limit_bytes=vmem_limit),
    )(x, x, w_fused, b4)

    # (N, H, 2, W, 2*Cout) is bit-identical to NHWC (N, 2H, 2W, Cout): pure
    # metadata reshape, no HBM traffic.
    return out5.reshape(N, 2 * H, 2 * W, Cout)


# ----------------------------------------------------------------------------
# PyTorch-interface wrapper (NCHW in / NCHW out) — compatibility only.
# The two boundary transposes move far more HBM bytes than the kernel itself;
# keep the surrounding model NHWC and call upsample_nhwc directly.
# ----------------------------------------------------------------------------
@jax.jit
def upsample_nchw(x_nchw, w_fused, b4):
    x = jnp.transpose(x_nchw, (0, 2, 3, 1))
    y = upsample_nhwc(x, w_fused, b4)
    return jnp.transpose(y, (0, 3, 1, 2))


# ----------------------------------------------------------------------------
# Pure-JAX reference (matches PyTorch ConvTranspose2d)
# ----------------------------------------------------------------------------
def _reference(x_nchw, weight, bias, *, stride=2, padding=1, output_padding=1):
    Cin, Cout, K, _ = weight.shape
    w_flip = weight[:, :, ::-1, ::-1]
    w_oihw = jnp.transpose(w_flip, (1, 0, 2, 3))
    pad_lo = K - 1 - padding
    pad_hi = K - 1 - padding + output_padding
    out = lax.conv_general_dilated(
        x_nchw, w_oihw, window_strides=(1, 1),
        padding=[(pad_lo, pad_hi), (pad_lo, pad_hi)],
        lhs_dilation=(stride, stride),
        dimension_numbers=("NCHW", "OIHW", "NCHW"),
        precision=lax.Precision.HIGHEST)
    return out + bias[None, :, None, None]


if __name__ == "__main__":
    key = jax.random.PRNGKey(0)
    kx, kw, kb = jax.random.split(key, 3)

    # Small but decoder-realistic widths: 2*Cout = 128 lanes per store, fused
    # contraction depth 4*Cin = 128.  (Cin < 64 under-fills lanes — acceptable
    # for the demo; production decoder stages have Cin >= 64.)
    N, Cin, Cout, H, W, K = 2, 32, 64, 16, 16, 3
    x_f32 = jax.random.normal(kx, (N, Cin, H, W), jnp.float32)
    fan = Cin * K * K
    weight = jax.random.uniform(kw, (Cin, Cout, K, K), jnp.float32,
                                minval=-1.0, maxval=1.0) / jnp.sqrt(fan)
    bias = jax.random.uniform(kb, (Cout,), jnp.float32,
                              minval=-1.0, maxval=1.0) / jnp.sqrt(fan)

    # bf16 activations + bf16 packed weights (native MXU path); packing hoisted
    # to init.  Accumulation / bias stay f32 inside the kernel.
    x_nchw = x_f32.astype(jnp.bfloat16)
    w_fused, b4 = pack_upsample_weights(weight, bias, compute_dtype=jnp.bfloat16)

    # Production path: NHWC in / NHWC out (no boundary transposes).
    x_nhwc = jnp.transpose(x_nchw, (0, 2, 3, 1))
    out_nhwc = jax.block_until_ready(upsample_nhwc(x_nhwc, w_fused, b4))

    # PyTorch-interface path (matches the nn.Module exactly).
    out_nchw = jax.block_until_ready(upsample_nchw(x_nchw, w_fused, b4))

    # Reference on the bf16-rounded operands, f32 accumulation.
    x_ref32 = x_nchw.astype(jnp.float32)
    w_ref32 = weight.astype(jnp.bfloat16).astype(jnp.float32)
    ref = _reference(x_ref32, w_ref32, bias)

    assert out_nchw.shape == (N, Cout, 2 * H, 2 * W), out_nchw.shape
    assert out_nhwc.shape == (N, 2 * H, 2 * W, Cout), out_nhwc.shape
    err_nchw = jnp.max(jnp.abs(out_nchw.astype(jnp.float32) - ref))
    err_nhwc = jnp.max(jnp.abs(out_nhwc.astype(jnp.float32)
                               - jnp.transpose(ref, (0, 2, 3, 1))))
    assert err_nchw < 2e-2 and err_nhwc < 2e-2, (err_nchw, err_nhwc)

    print("KERNEL_OK")
</pallas_src>

<mosaic_0001>
module attributes {stable_mosaic.version = 11 : i64} {
  func.func @_upsample_phase_kernel(%arg0: i32, %arg1: i32, %arg2: memref<1x4x16x32xbf16, #tpu.memory_space<vmem>>, %arg3: memref<1x1x16x32xbf16, #tpu.memory_space<vmem>>, %arg4: memref<128x256xbf16, #tpu.memory_space<vmem>>, %arg5: memref<1x256xf32, #tpu.memory_space<vmem>>, %arg6: memref<1x4x2x16x128xbf16, #tpu.memory_space<vmem>>) attributes {dimension_semantics = [#tpu.dimension_semantics<parallel>, #tpu.dimension_semantics<parallel>], iteration_bounds = array<i64: 2, 4>, scalar_prefetch = 0 : i64, scratch_operands = 0 : i64, tpu.core_type = #tpu.core_type<tc>, window_params = [{transform_indices = @transform_0, window_bounds = array<i64: 1, 4, 16, 32>}, {transform_indices = @transform_1, window_bounds = array<i64: 1, 1, 16, 32>}, {pipeline_mode = #tpu.pipeline_mode<synchronous>, transform_indices = @transform_2, window_bounds = array<i64: 128, 256>}, {pipeline_mode = #tpu.pipeline_mode<synchronous>, transform_indices = @transform_3, window_bounds = array<i64: 1, 256>}, {transform_indices = @transform_4, window_bounds = array<i64: 1, 4, 2, 16, 128>}]} {
    %c3_i32 = arith.constant 3 : i32
    %0 = arith.cmpi eq, %arg1, %c3_i32 : i32
    %c0 = arith.constant 0 : index
    %c0_0 = arith.constant 0 : index
    %c0_1 = arith.constant 0 : index
    %c0_2 = arith.constant 0 : index
    %1 = vector.load %arg2[%c0, %c0_0, %c0_1, %c0_2] : memref<1x4x16x32xbf16, #tpu.memory_space<vmem>>, vector<1x4x16x32xbf16>
    %2 = vector.shape_cast %1 : vector<1x4x16x32xbf16> to vector<4x16x32xbf16>
    %c0_3 = arith.constant 0 : index
    %c0_4 = arith.constant 0 : index
    %c0_5 = arith.constant 0 : index
    %c0_6 = arith.constant 0 : index
    %3 = vector.load %arg3[%c0_3, %c0_4, %c0_5, %c0_6] : memref<1x1x16x32xbf16, #tpu.memory_space<vmem>>, vector<1x1x16x32xbf16>
    %4 = vector.shape_cast %3 : vector<1x1x16x32xbf16> to vector<1x16x32xbf16>
    %cst = arith.constant 0.000000e+00 : f32
    %cst_7 = arith.constant 1.000000e+00 : f32
    %5 = arith.select %0, %cst, %cst_7 : f32
    %6 = arith.truncf %5 : f32 to bf16
    %7 = vector.broadcast %6 : bf16 to vector<1x16x32xbf16>
    %8 = arith.mulf %4, %7 : vector<1x16x32xbf16>
    %9 = tpu.concatenate %2, %8 in 0 : vector<4x16x32xbf16>, vector<1x16x32xbf16> -> vector<5x16x32xbf16>
    %cst_8 = arith.constant 0.000000e+00 : bf16
    %10 = vector.broadcast %cst_8 : bf16 to vector<5x1x32xbf16>
    %11 = tpu.concatenate %9, %10 in 1 : vector<5x16x32xbf16>, vector<5x1x32xbf16> -> vector<5x17x32xbf16>
    %12 = vector.extract_strided_slice %11 {offsets = [0, 0, 0], sizes = [4, 16, 32], strides = [1, 1, 1]} : vector<5x17x32xbf16> to vector<4x16x32xbf16>
    %13 = vector.extract_strided_slice %11 {offsets = [0, 1, 0], sizes = [4, 16, 32], strides = [1, 1, 1]} : vector<5x17x32xbf16> to vector<4x16x32xbf16>
    %14 = vector.extract_strided_slice %11 {offsets = [1, 0, 0], sizes = [4, 16, 32], strides = [1, 1, 1]} : vector<5x17x32xbf16> to vector<4x16x32xbf16>
    %15 = vector.extract_strided_slice %11 {offsets = [1, 1, 0], sizes = [4, 16, 32], strides = [1, 1, 1]} : vector<5x17x32xbf16> to vector<4x16x32xbf16>
    %16 = tpu.concatenate %12, %13, %14, %15 in 2 : vector<4x16x32xbf16>, vector<4x16x32xbf16>, vector<4x16x32xbf16>, vector<4x16x32xbf16> -> vector<4x16x128xbf16>
    %17 = vector.shape_cast %16 : vector<4x16x128xbf16> to vector<64x128xbf16>
    %c0_9 = arith.constant 0 : index
    %c0_10 = arith.constant 0 : index
    %18 = vector.load %arg4[%c0_9, %c0_10] : memref<128x256xbf16, #tpu.memory_space<vmem>>, vector<128x256xbf16>
    %cst_11 = arith.constant dense<0.000000e+00> : vector<64x256xf32>
    %19 = tpu.matmul %17, %18, %cst_11 {dimension_numbers = #tpu.dot_dimension_numbers<[1], [0], [0], [1], [0, 0, 1, 1], [], []>} : vector<64x128xbf16>, vector<128x256xbf16>, vector<64x256xf32> -> vector<64x256xf32>
    %c0_12 = arith.constant 0 : index
    %c0_13 = arith.constant 0 : index
    %20 = vector.load %arg5[%c0_12, %c0_13] : memref<1x256xf32, #tpu.memory_space<vmem>>, vector<1x256xf32>
    %21 = vector.broadcast %20 : vector<1x256xf32> to vector<64x256xf32>
    %22 = arith.addf %19, %21 : vector<64x256xf32>
    %23 = vector.shape_cast %22 : vector<64x256xf32> to vector<4x16x256xf32>
    %24 = vector.extract_strided_slice %23 {offsets = [0, 0, 0], sizes = [4, 16, 128], strides = [1, 1, 1]} : vector<4x16x256xf32> to vector<4x16x128xf32>
    %25 = arith.truncf %24 : vector<4x16x128xf32> to vector<4x16x128xbf16>
    %c0_14 = arith.constant 0 : index
    %c0_15 = arith.constant 0 : index
    %c0_16 = arith.constant 0 : index
    %c0_17 = arith.constant 0 : index
    %c0_18 = arith.constant 0 : index
    %26 = vector.load %arg6[%c0_14, %c0_15, %c0_16, %c0_17, %c0_18] : memref<1x4x2x16x128xbf16, #tpu.memory_space<vmem>>, vector<1x4x1x16x128xbf16>
    %27 = vector.shape_cast %26 : vector<1x4x1x16x128xbf16> to vector<4x16x128xbf16>
    %28 = vector.shape_cast %25 : vector<4x16x128xbf16> to vector<1x4x1x16x128xbf16>
    tpu.vector_store %arg6[%c0_14, %c0_15, %c0_16, %c0_17, %c0_18], %28 {strides = array<i32>} : memref<1x4x2x16x128xbf16, #tpu.memory_space<vmem>>, vector<1x4x1x16x128xbf16>,
    %29 = vector.extract_strided_slice %23 {offsets = [0, 0, 128], sizes = [4, 16, 128], strides = [1, 1, 1]} : vector<4x16x256xf32> to vector<4x16x128xf32>
    %30 = arith.truncf %29 : vector<4x16x128xf32> to vector<4x16x128xbf16>
    %c0_19 = arith.constant 0 : index
    %c0_20 = arith.constant 0 : index
    %c1 = arith.constant 1 : index
    %c0_21 = arith.constant 0 : index
    %c0_22 = arith.constant 0 : index
    %31 = vector.load %arg6[%c0_19, %c0_20, %c1, %c0_21, %c0_22] : memref<1x4x2x16x128xbf16, #tpu.memory_space<vmem>>, vector<1x4x1x16x128xbf16>
    %32 = vector.shape_cast %31 : vector<1x4x1x16x128xbf16> to vector<4x16x128xbf16>
    %33 = vector.shape_cast %30 : vector<4x16x128xbf16> to vector<1x4x1x16x128xbf16>
    tpu.vector_store %arg6[%c0_19, %c0_20, %c1, %c0_21, %c0_22], %33 {strides = array<i32>} : memref<1x4x2x16x128xbf16, #tpu.memory_space<vmem>>, vector<1x4x1x16x128xbf16>,
    return
  }
  func.func @transform_0(%arg0: i32, %arg1: i32) -> (i32, i32, i32, i32) {
    %c0_i32 = arith.constant 0 : i32
    %c0_i32_0 = arith.constant 0 : i32
    %c0_i32_1 = arith.constant 0 : i32
    return %arg0, %arg1, %c0_i32, %c0_i32_0 : i32, i32, i32, i32
  }
  func.func @transform_1(%arg0: i32, %arg1: i32) -> (i32, i32, i32, i32) {
    %c1_i32 = arith.constant 1 : i32
    %0 = arith.addi %arg1, %c1_i32 : i32
    %c4_i32 = arith.constant 4 : i32
    %1 = arith.muli %0, %c4_i32 : i32
    %c15_i32 = arith.constant 15 : i32
    %2 = arith.minsi %1, %c15_i32 : i32
    %c0_i32 = arith.constant 0 : i32
    %c0_i32_0 = arith.constant 0 : i32
    %c0_i32_1 = arith.constant 0 : i32
    return %arg0, %2, %c0_i32, %c0_i32_0 : i32, i32, i32, i32
  }
  func.func @transform_2(%arg0: i32, %arg1: i32) -> (i32, i32) {
    %c0_i32 = arith.constant 0 : i32
    %c0_i32_0 = arith.constant 0 : i32
    %c0_i32_1 = arith.constant 0 : i32
    return %c0_i32, %c0_i32_0 : i32, i32
  }
  func.func @transform_3(%arg0: i32, %arg1: i32) -> (i32, i32) {
    %c0_i32 = arith.constant 0 : i32
    %c0_i32_0 = arith.constant 0 : i32
    %c0_i32_1 = arith.constant 0 : i32
    return %c0_i32, %c0_i32_0 : i32, i32
  }
  func.func @transform_4(%arg0: i32, %arg1: i32) -> (i32, i32, i32, i32, i32) {
    %c0_i32 = arith.constant 0 : i32
    %c0_i32_0 = arith.constant 0 : i32
    %c0_i32_1 = arith.constant 0 : i32
    %c0_i32_2 = arith.constant 0 : i32
    return %arg0, %arg1, %c0_i32, %c0_i32_0, %c0_i32_1 : i32, i32, i32, i32, i32
  }
}

</mosaic_0001>

<llo_original>
// kernel: upsample_nhwc.1
$region0: #{upsample_nhwc.1}
  #allocation0 [shape = 'u32[]', space=smem, size = 0x4, offset = 0x4, fixed_abs, tag = 'smem constant byte address 0x4 - core index']
  #allocation1 [shape = 'u32[144,128]{1,0:T(1,128)}', space=vmem, size = 0x12000, scoped, tag = 'internal scratch']
  %s0 = inlined_call_operand.hbm [shape: bf16[2,16,16,32], index: 0, kind: input, shape index: {}, may-alias: {0,1}]
  %s1 = inlined_call_operand.hbm [shape: bf16[2,16,16,32], index: 1, kind: input, shape index: {}, may-alias: {0,1}]
  %s2 = inlined_call_operand.hbm [shape: bf16[128,256], index: 2, kind: input, shape index: {}]
  %s3 = inlined_call_operand.vmem [shape: f32[1,256], index: 3, kind: input, shape index: {}]
  %s4 = inlined_call_operand.vmem [shape: bf16[2,16,2,16,128], index: 4, kind: output, shape index: {}]
  %s5 = sld [smem:[#allocation0]]
  $region61: #{upsample_nhwc.1} parent=0
    _
  %s7 = ssub.s32 1, %s5
  %s8 = scalar_select 0, %s7, %s5
  $region1: #{upsample_nhwc.1} parent=0
    #allocation2 [shape = 'u8[32768]{0}', space=vmem, size = 0x8000, scoped, tag = 'input window, operand 0']
    #allocation3 [shape = 's32[2]{0}', space=sflag, size = 0x8, scoped, tag = 'scoped memory for upsample_nhwc.1']
    #allocation4 [shape = 'u8[8192]{0}', space=vmem, size = 0x2000, scoped, tag = 'input window, operand 1']
    #allocation5 [shape = 's32[2]{0}', space=sflag, size = 0x8, scoped, tag = 'scoped memory for upsample_nhwc.1']
    #allocation6 [shape = 'u8[65536]{0}', space=vmem, size = 0x10000, scoped, tag = 'input window, operand 2, single buffered']
    %9 = vsyncpa [#allocation3], 0
    %s10 = scalar_lea.sflag [#allocation3], 1
    %11 = vsyncpa %s10, 0
    %12 = vsyncpa [#allocation5], 0
    %s13 = scalar_lea.sflag [#allocation5], 1
    %14 = vsyncpa %s13, 0
    loop: start=0, step=1, limit=10
    $region2: #{upsample_nhwc.1} parent=1 // loop_pre_header
      _
    $region3: #{upsample_nhwc.1} parent=1 // loop_header
      %s16 = sphi 0, %s20
      %p17 = scmp.ge.s32.totalorder %s16, 10
      %s23 = sphi 0, %s35
      %s24 = sphi 0, %s31
      %s25 = sphi 0, %s23
      %s26 = sphi 0, %s24
      %s27 = sphi 0, %s25
      %s28 = sphi 0, %s26
      %s40 = sphi 0, %s42
      %s43 = sphi 0, %s40
      %s44 = sphi 0, %s43
      %s60 = sphi 0, %s44
      %s76 = sphi 0, %s78
      %s79 = sphi 0, %s76
      %s80 = sphi 0, %s79
      %s96 = sphi 0, %s80
      %s100 = sphi 0, %s100
      %s102 = sphi 0, %s100
      %s103 = sphi 0, %s102
      %s117 = sphi 0, %s103
      %s121 = sphi 0, %s121
      %s123 = sphi 0, %s121
      %s124 = sphi 0, %s123
      %s138 = sphi 0, %s124
      %s146 = sphi 0, %s148
      %s149 = sphi 0, %s146
      %s150 = sphi 0, %s149
      %s166 = sphi 0, %s150
    $region4: #{upsample_nhwc.1} parent=1 // loop_header_branch
      %19 = sbr.rel (%p17) target = $region8
    $region5: #{upsample_nhwc.1} parent=1 // loop_body
      %s21 = ssub.s32 %s16, 1
      %s22 = ssub.s32 %s16, 2
      %s29 = sadd.s32 1, %s24
      %p30 = scmp.ge.s32.totalorder %s29, 4
      %s31 = scalar_select %p30, 0, %s29
      %s32 = sadd.s32 1, %s23
      %s33 = scalar_select %p30, %s32, %s23
      %p34 = scmp.ge.s32.totalorder %s33, 2
      %s35 = scalar_select %p34, 0, %s33
      %s36 = ssub.s32 %s23, %s35
      %s37 = ssub.s32 %s24, %s31
      %s38 = sor.u32 %s36, %s37
      %p39 = scmp.eq.s32.totalorder %s38, 0
      %s41 = sadd.s32 %s40, 1
      %s42 = scalar_select %p39, %s40, %s41
      %p45 = pneg %p39
      %p46 = scmp.eq.s32.totalorder %s16, 7
      %p47 = por %p45, %p46
      %p48 = scmp.ne.s32.totalorder %s40, %s43
      %p49 = scmp.eq.s32.totalorder %s16, 0
      %p50 = por %p48, %p49
      %p51 = scmp.ne.s32.totalorder %s40, %s43
      %p52 = scmp.eq.s32.totalorder %s21, 7
      %p53 = por %p51, %p52
      %p54 = scmp.ne.s32.totalorder %s43, %s44
      %p55 = scmp.eq.s32.totalorder %s21, 0
      %p56 = por %p54, %p55
      %p57 = scmp.ne.s32.totalorder %s43, %s44
      %p58 = scmp.eq.s32.totalorder %s22, 7
      %p59 = por %p57, %p58
      %p61 = scmp.ne.s32.totalorder %s44, %s60
      %p62 = scmp.eq.s32.totalorder %s22, 0
      %p63 = por %p61, %p62
      %s64 = sadd.s32 %s24, 1
      %s65 = smul.u32 %s64, 4
      %p66 = scmp.lt.s32.totalorder %s65, 15
      %s67 = scalar_select %p66, %s65, 15
      %s68 = sadd.s32 %s31, 1
      %s69 = smul.u32 %s68, 4
      %p70 = scmp.lt.s32.totalorder %s69, 15
      %s71 = scalar_select %p70, %s69, 15
      %s72 = ssub.s32 %s23, %s35
      %s73 = ssub.s32 %s67, %s71
      %s74 = sor.u32 %s72, %s73
      %p75 = scmp.eq.s32.totalorder %s74, 0
      %s77 = sadd.s32 %s76, 1
      %s78 = scalar_select %p75, %s76, %s77
      %p81 = pneg %p75
      %p82 = scmp.eq.s32.totalorder %s16, 7
      %p83 = por %p81, %p82
      %p84 = scmp.ne.s32.totalorder %s76, %s79
      %p85 = scmp.eq.s32.totalorder %s16, 0
      %p86 = por %p84, %p85
      %p87 = scmp.ne.s32.totalorder %s76, %s79
      %p88 = scmp.eq.s32.totalorder %s21, 7
      %p89 = por %p87, %p88
      %p90 = scmp.ne.s32.totalorder %s79, %s80
      %p91 = scmp.eq.s32.totalorder %s21, 0
      %p92 = por %p90, %p91
      %p93 = scmp.ne.s32.totalorder %s79, %s80
      %p94 = scmp.eq.s32.totalorder %s22, 7
      %p95 = por %p93, %p94
      %p97 = scmp.ne.s32.totalorder %s80, %s96
      %p98 = scmp.eq.s32.totalorder %s22, 0
      %p99 = por %p97, %p98
      %s101 = sadd.s32 %s100, 1
      %p104 = scmp.eq.s32.totalorder %s16, 7
      %p105 = scmp.ne.s32.totalorder %s100, %s102
      %p106 = scmp.eq.s32.totalorder %s16, 0
      %p107 = por %p105, %p106
      %p108 = scmp.ne.s32.totalorder %s100, %s102
      %p109 = scmp.eq.s32.totalorder %s21, 7
      %p110 = por %p108, %p109
      %p111 = scmp.ne.s32.totalorder %s102, %s103
      %p112 = scmp.eq.s32.totalorder %s21, 0
      %p113 = por %p111, %p112
      %p114 = scmp.ne.s32.totalorder %s102, %s103
      %p115 = scmp.eq.s32.totalorder %s22, 7
      %p116 = por %p114, %p115
      %p118 = scmp.ne.s32.totalorder %s103, %s117
      %p119 = scmp.eq.s32.totalorder %s22, 0
      %p120 = por %p118, %p119
      %s122 = sadd.s32 %s121, 1
      %p125 = scmp.eq.s32.totalorder %s16, 7
      %p126 = scmp.ne.s32.totalorder %s121, %s123
      %p127 = scmp.eq.s32.totalorder %s16, 0
      %p128 = por %p126, %p127
      %p129 = scmp.ne.s32.totalorder %s121, %s123
      %p130 = scmp.eq.s32.totalorder %s21, 7
      %p131 = por %p129, %p130
      %p132 = scmp.ne.s32.totalorder %s123, %s124
      %p133 = scmp.eq.s32.totalorder %s21, 0
      %p134 = por %p132, %p133
      %p135 = scmp.ne.s32.totalorder %s123, %s124
      %p136 = scmp.eq.s32.totalorder %s22, 7
      %p137 = por %p135, %p136
      %p139 = scmp.ne.s32.totalorder %s124, %s138
      %p140 = scmp.eq.s32.totalorder %s22, 0
      %p141 = por %p139, %p140
      %s142 = ssub.s32 %s23, %s35
      %s143 = ssub.s32 %s24, %s31
      %s144 = sor.u32 %s142, %s143
      %p145 = scmp.eq.s32.totalorder %s144, 0
      %s147 = sadd.s32 %s146, 1
      %s148 = scalar_select %p145, %s146, %s147
      %p151 = pneg %p145
      %p152 = scmp.eq.s32.totalorder %s16, 7
      %p153 = por %p151, %p152
      %p154 = scmp.ne.s32.totalorder %s146, %s149
      %p155 = scmp.eq.s32.totalorder %s16, 0
      %p156 = por %p154, %p155
      %p157 = scmp.ne.s32.totalorder %s146, %s149
      %p158 = scmp.eq.s32.totalorder %s21, 7
      %p159 = por %p157, %p158
      %p160 = scmp.ne.s32.totalorder %s149, %s150
      %p161 = scmp.eq.s32.totalorder %s21, 0
      %p162 = por %p160, %p161
      %p163 = scmp.ne.s32.totalorder %s149, %s150
      %p164 = scmp.eq.s32.totalorder %s22, 7
      %p165 = por %p163, %p164
      %p167 = scmp.ne.s32.totalorder %s150, %s166
      %p168 = scmp.eq.s32.totalorder %s22, 0
      %p169 = por %p167, %p168
      %p170 = scmp.le.s32.totalorder 1, %s16
      %p171 = scmp.lt.s32.totalorder %s16, 9
      %p172 = pnand %p170, %p171
      %p173 = pneg %p172
      // Predicated region
      $region9: #{upsample_nhwc.1} parent=5 // pred_check
        _
      $region10: #{upsample_nhwc.1} parent=5 // pred_check_branch
        %175 = sbr.rel (%p172) target = $region12
      $region11: #{upsample_nhwc.1} parent=5 // pred_region
        %s176 = ssub.s32 %s16, 1
        // Predicated region
        $region13: #{upsample_nhwc.1} parent=11 // pred_check
          %p177 = pneg %p113
        $region14: #{upsample_nhwc.1} parent=11 // pred_check_branch
          %179 = sbr.rel (%p177) target = $region16
        $region15: #{upsample_nhwc.1} parent=11 // pred_region
          %s181 = ssub.s32 2048, 2048
          %182 = vsyncadd [#allocation5], %s181
          %s183 = sshll.u32 [#allocation6], 4
          %s184 = int_to_ptr.vmem [resolvable:$true] %s183
          %189 = dma.hbm_to_vmem [thread:$0]  %s2, 2048, %s184, [#allocation5], 128, 128, 8
        $region16: #{upsample_nhwc.1} parent=11 // pred_fallthru
          _
        // Predicated region
        $region17: #{upsample_nhwc.1} parent=11 // pred_check
          %p190 = pneg %p134
        $region18: #{upsample_nhwc.1} parent=11 // pred_check_branch
          %192 = sbr.rel (%p190) target = $region20
        $region19: #{upsample_nhwc.1} parent=11 // pred_region
          _
        $region20: #{upsample_nhwc.1} parent=11 // pred_fallthru
          _
      $region12: #{upsample_nhwc.1} parent=5 // pred_fallthru
        _
      %p193 = scmp.lt.s32.totalorder %s16, 8
      // Predicated region
      $region21: #{upsample_nhwc.1} parent=5 // pred_check
        %p194 = pneg %p193
      $region22: #{upsample_nhwc.1} parent=5 // pred_check_branch
        %196 = sbr.rel (%p194) target = $region24
      $region23: #{upsample_nhwc.1} parent=5 // pred_region
        // Predicated region
        $region25: #{upsample_nhwc.1} parent=23 // pred_check
          %p197 = pneg %p50
        $region26: #{upsample_nhwc.1} parent=23 // pred_check_branch
          %199 = sbr.rel (%p197) target = $region28
        $region27: #{upsample_nhwc.1} parent=23 // pred_region
          %s200 = sand.u32 %s40, 1
          %s201 = scalar_lea.sflag [#allocation3], %s200
          %s202 = sand.u32 %s40, 1
          %s203 = smul.addr %s202, 32
          %s204 = scalar_lea.vmem [#allocation2], %s203
          %s205 = smul.u32 4, %s24
          %s207 = ssub.s32 512, 512
          %208 = vsyncadd %s201, %s207
          %s209 = smul.addr %s205, 2
          %s210 = smul.addr %s23, 32
          %s211 = sadd.s32 %s209, %s210
          %s212 = smul.addr %s211, 64
          %s213 = scalar_lea.hbm %s0, %s212
          %s214 = sshll.u32 %s204, 4
          %s215 = int_to_ptr.vmem [resolvable:$true] %s214
          %220 = dma.hbm_to_vmem [thread:$0]  %s213, 512, %s215, %s201, 64, 64, 4
        $region28: #{upsample_nhwc.1} parent=23 // pred_fallthru
          _
        // Predicated region
        $region29: #{upsample_nhwc.1} parent=23 // pred_check
          %p221 = pneg %p86
        $region30: #{upsample_nhwc.1} parent=23 // pred_check_branch
          %223 = sbr.rel (%p221) target = $region32
        $region31: #{upsample_nhwc.1} parent=23 // pred_region
          %s224 = sand.u32 %s16, 1
          %s225 = scalar_lea.sflag [#allocation5], %s224
          %s226 = sand.u32 %s76, 1
          %s227 = smul.addr %s226, 8
          %s228 = scalar_lea.vmem [#allocation4], %s227
          %s229 = sadd.s32 %s24, 1
          %s230 = smul.u32 %s229, 4
          %p231 = scmp.lt.s32.totalorder %s230, 15
          %s232 = scalar_select %p231, %s230, 15
          %s234 = ssub.s32 128, 128
          %235 = vsyncadd %s225, %s234
          %s236 = smul.addr %s232, 2
          %s237 = smul.addr %s23, 32
          %s238 = sadd.s32 %s236, %s237
          %s239 = smul.addr %s238, 64
          %s240 = scalar_lea.hbm %s1, %s239
          %s241 = sshll.u32 %s228, 4
          %s242 = int_to_ptr.vmem [resolvable:$true] %s241
          %247 = dma.hbm_to_vmem [thread:$0]  %s240, 128, %s242, %s225, 64, 64, 4
        $region32: #{upsample_nhwc.1} parent=23 // pred_fallthru
          _
      $region24: #{upsample_nhwc.1} parent=5 // pred_fallthru
        _
      %p248 = scmp.le.s32.totalorder 1, %s16
      %p249 = scmp.lt.s32.totalorder %s16, 9
      %p250 = pnand %p248, %p249
      %p251 = pneg %p250
      // Predicated region
      $region33: #{upsample_nhwc.1} parent=5 // pred_check
        _
      $region34: #{upsample_nhwc.1} parent=5 // pred_check_branch
        %253 = sbr.rel (%p250) target = $region36
      $region35: #{upsample_nhwc.1} parent=5 // pred_region
        %s254 = ssub.s32 %s16, 1
        %s255 = sand.u32 %s43, 1
        %s256 = scalar_lea.sflag [#allocation3], %s255
        %s257 = sand.u32 %s43, 1
        %s258 = smul.addr %s257, 32
        %s259 = scalar_lea.vmem [#allocation2], %s258
        // Predicated region
        $region37: #{upsample_nhwc.1} parent=35 // pred_check
          %p260 = pneg %p56
        $region38: #{upsample_nhwc.1} parent=35 // pred_check_branch
          %262 = sbr.rel (%p260) target = $region40
        $region39: #{upsample_nhwc.1} parent=35 // pred_region
          %263 = dma.done %s256, 512
        $region40: #{upsample_nhwc.1} parent=35 // pred_fallthru
          _
        %s264 = sand.u32 %s21, 1
        %s265 = scalar_lea.sflag [#allocation5], %s264
        %s266 = sand.u32 %s79, 1
        %s267 = smul.addr %s266, 8
        %s268 = scalar_lea.vmem [#allocation4], %s267
        // Predicated region
        $region41: #{upsample_nhwc.1} parent=35 // pred_check
          %p269 = pneg %p92
        $region42: #{upsample_nhwc.1} parent=35 // pred_check_branch
          %271 = sbr.rel (%p269) target = $region44
        $region43: #{upsample_nhwc.1} parent=35 // pred_region
          %272 = dma.done %s265, 128
        $region44: #{upsample_nhwc.1} parent=35 // pred_fallthru
          _
        // Predicated region
        $region45: #{upsample_nhwc.1} parent=35 // pred_check
          %p273 = pneg %p113
        $region46: #{upsample_nhwc.1} parent=35 // pred_check_branch
          %275 = sbr.rel (%p273) target = $region48
        $region47: #{upsample_nhwc.1} parent=35 // pred_region
          %276 = dma.done [#allocation5], 2048
        $region48: #{upsample_nhwc.1} parent=35 // pred_fallthru
          _
        %s277 = sand.u32 %s43, 1
        %s278 = scalar_lea.sflag [#allocation3], %s277
        %s279 = sand.u32 %s43, 1
        %s280 = smul.addr %s279, 32
        %s281 = scalar_lea.vmem [#allocation2], %s280
        %p282 = pneg %p56
        %p283 = pneg %p53
        %s284 = sand.u32 %s21, 1
        %s285 = scalar_lea.sflag [#allocation5], %s284
        %s286 = sand.u32 %s79, 1
        %s287 = smul.addr %s286, 8
        %s288 = scalar_lea.vmem [#allocation4], %s287
        %p289 = pneg %p92
        %p290 = pneg %p89
        %p291 = pneg %p113
        %p292 = pneg %p110
        %p293 = pneg %p134
        %p294 = pneg %p131
        %p295 = pneg %p162
        %p296 = pneg %p159
        %s297 = smul.u32 4, %s26
        %p298 = scmp.lt.s32.totalorder %s25, 1
        %s299 = scalar_select %p298, %s25, 1
        %p300 = scmp.lt.s32.totalorder %s297, 15
        %s301 = scalar_select %p300, %s297, 15
        %s302 = smul.addr %s301, 4
        %s303 = smul.addr %s299, 64
        %s304 = sadd.s32 %s302, %s303
        %s305 = smul.addr %s304, 4
        %s306 = scalar_lea.vmem %s4, %s305
        %s307 = smul.u32 4, %s26
        %s308 = sadd.s32 %s26, 1
        %s309 = smul.u32 %s308, 4
        %p310 = scmp.lt.s32.totalorder %s309, 15
        %s311 = scalar_select %p310, %s309, 15
        %s312 = smul.u32 4, %s26
        %p313 = scmp.lt.s32.totalorder %s25, 1
        %s314 = scalar_select %p313, %s25, 1
        %p315 = scmp.lt.s32.totalorder %s312, 15
        %s316 = scalar_select %p315, %s312, 15
        %s317 = smul.addr %s316, 4
        %s318 = smul.addr %s314, 64
        %s319 = sadd.s32 %s317, %s318
        %s320 = smul.addr %s319, 4
        %s321 = scalar_lea.vmem %s4, %s320
        %s322 = smul.u32 4, %s26
        %p324 = scmp.eq.s32.totalorder %s26, 3
        %v325 = vld [vmem:[%s259] sm:$0xf]
        %v326 = vld [vmem:[%s259 + $0x4] sm:$0xf]
        %v327 = vld [vmem:[%s259 + $0x8] sm:$0xf]
        %v328 = vld [vmem:[%s259 + $0xc] sm:$0xf]
        %v329 = vld [vmem:[%s259 + $0x10] sm:$0xf]
        %v330 = vld [vmem:[%s259 + $0x14] sm:$0xf]
        %v331 = vld [vmem:[%s259 + $0x18] sm:$0xf]
        %v332 = vld [vmem:[%s259 + $0x1c] sm:$0xf]
        %v333 = vld [vmem:[%s268] sm:$0xf]
        %v334 = vld [vmem:[%s268 + $0x4] sm:$0xf]
        %s335 = scalar_select %p324, 0.0, 1.0
        %p337 = scmp.ne.f32.partialorder %s335, %s335
        %s338 = sshrl.u32 %s335, 16
        %s339 = sand.u32 %s338, 1
        %s340 = sadd.s32 32767, %s339
        %s341 = sadd.s32 %s335, %s340
        %s342 = sand.u32 %s341, 4294901760
        %s343 = scalar_select %p337, 2143289344, %s342
        %s345 = sshrl.u32 %s343, 16
        %s346 = sshll.u32 %s345, 16
        %s347 = sor.u32 %s345, %s346
        %v348 = vstv %s347
        %v350 = vmul.bf16 %v333, %v348
        %v351 = vmul.bf16 %v334, %v348
        %v362 = vunpack.c.l.b16 %v325
        %v363 = vunpack.c.l.b16 %v326
        %v364 = vunpack.c.l.b16 %v327
        %v365 = vunpack.c.l.b16 %v328
        %v366 = vunpack.c.l.b16 %v329
        %v367 = vunpack.c.l.b16 %v330
        %v368 = vunpack.c.l.b16 %v331
        %v369 = vunpack.c.l.b16 %v332
        %v370 = vunpack.c.l.b16 %v350
        %v371 = vunpack.c.l.b16 %v351
        %v372 = vpack.c.b16 %v363, %v362
        %v373 = vpack.c.b16 %v365, %v364
        %v374 = vpack.c.b16 %v367, %v366
        %v375 = vpack.c.b16 %v369, %v368
        %v376 = vpack.c.b16 %v371, %v370
        %vm377 = vsmask.f32 7424
        %v379 = vshrl.u32 %v372, 16
        %v381 = vshll.u32 %v372, 16
        %v383 = vrot.slane %v381, 1
        %v384 = vor.u32 %v379, %v383
        %v386 = vshll.u32 0, 16
        %v388 = vrot.slane %v386, 1
        %v389 = vsel %vm377, %v384, %v388
        %v391 = vshrl.u32 %v373, 16
        %v393 = vshll.u32 %v373, 16
        %v395 = vrot.slane %v393, 1
        %v396 = vor.u32 %v391, %v395
        %v397 = vsel %vm377, %v396, %v388
        %v399 = vshrl.u32 %v374, 16
        %v401 = vshll.u32 %v374, 16
        %v403 = vrot.slane %v401, 1
        %v404 = vor.u32 %v399, %v403
        %v405 = vsel %vm377, %v404, %v388
        %v407 = vshrl.u32 %v375, 16
        %v409 = vshll.u32 %v375, 16
        %v411 = vrot.slane %v409, 1
        %v412 = vor.u32 %v407, %v411
        %v413 = vsel %vm377, %v412, %v388
        %414 = vrot.lane.b32.xlu0 %v389, 32
        %v415 = vpop.permute.xlu0 %414
        %416 = vrot.lane.b32.xlu0 %v397, 32
        %v417 = vpop.permute.xlu0 %416
        %418 = vrot.lane.b32.xlu0 %v405, 32
        %v419 = vpop.permute.xlu0 %418
        %420 = vrot.lane.b32.xlu0 %v413, 32
        %v421 = vpop.permute.xlu0 %420
        %422 = vrot.lane.b32.xlu0 %v373, 64
        %v423 = vpop.permute.xlu0 %422
        %424 = vrot.lane.b32.xlu0 %v374, 64
        %v425 = vpop.permute.xlu0 %424
        %426 = vrot.lane.b32.xlu0 %v375, 64
        %v427 = vpop.permute.xlu0 %426
        %428 = vrot.lane.b32.xlu0 %v376, 64
        %v429 = vpop.permute.xlu0 %428
        %v431 = vshrl.u32 %v376, 16
        %v433 = vshll.u32 %v376, 16
        %v435 = vrot.slane %v433, 1
        %v436 = vor.u32 %v431, %v435
        %v437 = vsel %vm377, %v436, %v388
        %438 = vrot.lane.b32.xlu0 %v397, 96
        %v439 = vpop.permute.xlu0 %438
        %440 = vrot.lane.b32.xlu0 %v405, 96
        %v441 = vpop.permute.xlu0 %440
        %442 = vrot.lane.b32.xlu0 %v413, 96
        %v443 = vpop.permute.xlu0 %442
        %444 = vrot.lane.b32.xlu0 %v437, 96
        %v445 = vpop.permute.xlu0 %444
        %vm446 = vcmask 261120
        %v448 = vsel %vm446, %v372, %v415
        %v450 = vsel %vm446, %v373, %v417
        %v452 = vsel %vm446, %v374, %v419
        %v454 = vsel %vm446, %v375, %v421
        %vm455 = vcmask 523264
        %v457 = vsel %vm455, %v448, %v423
        %v459 = vsel %vm455, %v450, %v425
        %v461 = vsel %vm455, %v452, %v427
        %v463 = vsel %vm455, %v454, %v429
        %vm464 = vcmask 785408
        %v466 = vsel %vm464, %v457, %v439
        %v469 = vsel %vm464, %v459, %v441
        %v472 = vsel %vm464, %v461, %v443
        %v475 = vsel %vm464, %v463, %v445
        %v477 = vld [vmem:[#allocation6] sm:$0xff]
        %v478 = vld [vmem:[#allocation6 + $0x8] sm:$0xff]
        %v479 = vld [vmem:[#allocation6 + $0x10] sm:$0xff]
        %v480 = vld [vmem:[#allocation6 + $0x18] sm:$0xff]
        %v481 = vld [vmem:[#allocation6 + $0x20] sm:$0xff]
        %v482 = vld [vmem:[#allocation6 + $0x28] sm:$0xff]
        %v483 = vld [vmem:[#allocation6 + $0x30] sm:$0xff]
        %v484 = vld [vmem:[#allocation6 + $0x38] sm:$0xff]
        %v485 = vld [vmem:[#allocation6 + $0x40] sm:$0xff]
        %v486 = vld [vmem:[#allocation6 + $0x48] sm:$0xff]
        %v487 = vld [vmem:[#allocation6 + $0x50] sm:$0xff]
        %v488 = vld [vmem:[#allocation6 + $0x58] sm:$0xff]
        %v489 = vld [vmem:[#allocation6 + $0x60] sm:$0xff]
        %v490 = vld [vmem:[#allocation6 + $0x68] sm:$0xff]
        %v491 = vld [vmem:[#allocation6 + $0x70] sm:$0xff]
        %v492 = vld [vmem:[#allocation6 + $0x78] sm:$0xff]
        %v493 = vld [vmem:[%s3] sm:$0x3]
        %v495 = vlaneseq
        %v496 = vshrl.u32 %v495, 7
        %v497 = vsub.s32 0, %v496
        %v498 = vrot.slane %v493, %v497
        %v499 = vlaneseq
        %v500 = vshrl.u32 %v499, 7
        %v501 = vsub.s32 1, %v500
        %v502 = vrot.slane %v493, %v501
        %v521 = vunpack.c.l.b16 %v477
        %v522 = vunpack.c.h.b16 %v477
        %v523 = vunpack.c.l.b16 %v478
        %v524 = vunpack.c.h.b16 %v478
        %v525 = vunpack.c.l.b16 %v479
        %v526 = vunpack.c.h.b16 %v479
        %v527 = vunpack.c.l.b16 %v480
        %v528 = vunpack.c.h.b16 %v480
        %v529 = vunpack.c.l.b16 %v481
        %v530 = vunpack.c.h.b16 %v481
        %v531 = vunpack.c.l.b16 %v482
        %v532 = vunpack.c.h.b16 %v482
        %v533 = vunpack.c.l.b16 %v483
        %v534 = vunpack.c.h.b16 %v483
        %v535 = vunpack.c.l.b16 %v484
        %v536 = vunpack.c.h.b16 %v484
        %v537 = vunpack.c.l.b16 %v485
        %v538 = vunpack.c.h.b16 %v485
        %v539 = vunpack.c.l.b16 %v486
        %v540 = vunpack.c.h.b16 %v486
        %v541 = vunpack.c.l.b16 %v487
        %v542 = vunpack.c.h.b16 %v487
        %v543 = vunpack.c.l.b16 %v488
        %v544 = vunpack.c.h.b16 %v488
        %v545 = vunpack.c.l.b16 %v489
        %v546 = vunpack.c.h.b16 %v489
        %v547 = vunpack.c.l.b16 %v490
        %v548 = vunpack.c.h.b16 %v490
        %v549 = vunpack.c.l.b16 %v491
        %v550 = vunpack.c.h.b16 %v491
        %v551 = vunpack.c.l.b16 %v492
        %v552 = vunpack.c.h.b16 %v492
        %v553 = vpack.c.b16 %v523, %v521
        %v554 = vpack.c.b16 %v524, %v522
        %v555 = vpack.c.b16 %v527, %v525
        %v556 = vpack.c.b16 %v528, %v526
        %v557 = vpack.c.b16 %v531, %v529
        %v558 = vpack.c.b16 %v532, %v530
        %v559 = vpack.c.b16 %v535, %v533
        %v560 = vpack.c.b16 %v536, %v534
        %v561 = vpack.c.b16 %v539, %v537
        %v562 = vpack.c.b16 %v540, %v538
        %v563 = vpack.c.b16 %v543, %v541
        %v564 = vpack.c.b16 %v544, %v542
        %v565 = vpack.c.b16 %v547, %v545
        %v566 = vpack.c.b16 %v548, %v546
        %v567 = vpack.c.b16 %v551, %v549
        %v568 = vpack.c.b16 %v552, %v550
        %585 = vmatprep.subr.bf16.mxu0 %v554
        %586 = vmatpush1.bf16.msra.mxu0 %v553
        %587 = vmatprep.subr.bf16.mxu0 %v556
        %588 = vmatpush1.bf16.msra.mxu0 %v555
        %589 = vmatprep.subr.bf16.mxu0 %v558
        %590 = vmatpush1.bf16.msra.mxu0 %v557
        %591 = vmatprep.subr.bf16.mxu0 %v560
        %592 = vmatpush1.bf16.msra.mxu0 %v559
        %593 = vmatprep.subr.bf16.mxu0 %v562
        %594 = vmatpush1.bf16.msra.mxu0 %v561
        %595 = vmatprep.subr.bf16.mxu0 %v564
        %596 = vmatpush1.bf16.msra.mxu0 %v563
        %597 = vmatprep.subr.bf16.mxu0 %v566
        %598 = vmatpush1.bf16.msra.mxu0 %v565
        %599 = vmatprep.subr.bf16.mxu0 %v568
        %600 = vmatpush1.bf16.msra.mxu0 %v567
        %601 = vmatprep.subr.bf16.mxu0 0
        %602 = vmatpush1.bf16.msra.mxu0 0
        %603 = vmatprep.subr.bf16.mxu0 0
        %604 = vmatpush1.bf16.msra.mxu0 0
        %605 = vmatprep.subr.bf16.mxu0 0
        %606 = vmatpush1.bf16.msra.mxu0 0
        %607 = vmatprep.subr.bf16.mxu0 0
        %608 = vmatpush1.bf16.msra.mxu0 0
        %609 = vmatprep.subr.bf16.mxu0 0
        %610 = vmatpush1.bf16.msra.mxu0 0
        %611 = vmatprep.subr.bf16.mxu0 0
        %612 = vmatpush1.bf16.msra.mxu0 0
        %613 = vmatprep.subr.bf16.mxu0 0
        %614 = vmatpush1.bf16.msra.mxu0 0
        %615 = vmatprep.subr.bf16.mxu0 0
        %616 = vmatpush1.bf16.msra.mxu0 0
        %617 = vmatprep.mubr.bf16.mxu0 0
        %618 = vmatmul.mubr.bf16.gmra.mrb[0].mxu0 %v466
        %v619 = vpop.f32.mrb[0].mxu0
        %v620 = vadd.f32 %v498, %v619
        %v621 = vpop.f32.mrb[0].mxu0
        %v622 = vadd.f32 %v502, %v621
        %v623 = vpop.f32.mrb[0].mxu0
        %v624 = vadd.f32 %v498, %v623
        %v625 = vpop.f32.mrb[0].mxu0
        %v626 = vadd.f32 %v502, %v625
        %627 = vmatprep.mubr.bf16.mxu0 0
        %628 = vmatmul.mubr.bf16.gmra.mrb[0].mxu0 %v469
        %v629 = vpop.f32.mrb[0].mxu0
        %v630 = vadd.f32 %v498, %v629
        %v631 = vpop.f32.mrb[0].mxu0
        %v632 = vadd.f32 %v502, %v631
        %v633 = vpop.f32.mrb[0].mxu0
        %v634 = vadd.f32 %v498, %v633
        %v635 = vpop.f32.mrb[0].mxu0
        %v636 = vadd.f32 %v502, %v635
        %637 = vmatprep.mubr.bf16.mxu0 0
        %638 = vmatmul.mubr.bf16.gmra.mrb[0].mxu0 %v472
        %v639 = vpop.f32.mrb[0].mxu0
        %v640 = vadd.f32 %v498, %v639
        %v641 = vpop.f32.mrb[0].mxu0
        %v642 = vadd.f32 %v502, %v641
        %v643 = vpop.f32.mrb[0].mxu0
        %v644 = vadd.f32 %v498, %v643
        %v645 = vpop.f32.mrb[0].mxu0
        %v646 = vadd.f32 %v502, %v645
        %647 = vmatprep.mubr.bf16.mxu0 0
        %648 = vmatmul.mubr.bf16.gmra.mrb[0].mxu0 %v475
        %v649 = vpop.f32.mrb[0].mxu0
        %v650 = vadd.f32 %v498, %v649
        %v651 = vpop.f32.mrb[0].mxu0
        %v652 = vadd.f32 %v502, %v651
        %v653 = vpop.f32.mrb[0].mxu0
        %v654 = vadd.f32 %v498, %v653
        %v655 = vpop.f32.mrb[0].mxu0
        %v656 = vadd.f32 %v502, %v655
        %657 = vdwg.mxu0
        %v658 = vpack.c.bf16 %v624, %v620
        %v659 = vpack.c.bf16 %v634, %v630
        %v660 = vpack.c.bf16 %v644, %v640
        %v661 = vpack.c.bf16 %v654, %v650
        %v666 = vunpack.c.l.b16 %v658
        %v667 = vunpack.c.h.b16 %v658
        %v668 = vunpack.c.l.b16 %v659
        %v669 = vunpack.c.h.b16 %v659
        %v670 = vunpack.c.l.b16 %v660
        %v671 = vunpack.c.h.b16 %v660
        %v672 = vunpack.c.l.b16 %v661
        %v673 = vunpack.c.h.b16 %v661
        %v674 = vpack.c.b16 %v666, %v666
        %v675 = vpack.c.b16 %v667, %v667
        %v676 = vpack.c.b16 %v668, %v668
        %v677 = vpack.c.b16 %v669, %v669
        %v678 = vpack.c.b16 %v670, %v670
        %v679 = vpack.c.b16 %v671, %v671
        %v680 = vpack.c.b16 %v672, %v672
        %v681 = vpack.c.b16 %v673, %v673
        %690 = vst [vmem:[%s321] sm:$0xf] %v674
        %691 = vst [vmem:[%s321 + $0x4] sm:$0xf] %v675
        %692 = vst [vmem:[%s321 + $0x10] sm:$0xf] %v676
        %693 = vst [vmem:[%s321 + $0x14] sm:$0xf] %v677
        %694 = vst [vmem:[%s321 + $0x20] sm:$0xf] %v678
        %695 = vst [vmem:[%s321 + $0x24] sm:$0xf] %v679
        %696 = vst [vmem:[%s321 + $0x30] sm:$0xf] %v680
        %697 = vst [vmem:[%s321 + $0x34] sm:$0xf] %v681
        %v698 = vpack.c.bf16 %v626, %v622
        %v699 = vpack.c.bf16 %v636, %v632
        %v700 = vpack.c.bf16 %v646, %v642
        %v701 = vpack.c.bf16 %v656, %v652
        %v706 = vunpack.c.l.b16 %v698
        %v707 = vunpack.c.h.b16 %v698
        %v708 = vunpack.c.l.b16 %v699
        %v709 = vunpack.c.h.b16 %v699
        %v710 = vunpack.c.l.b16 %v700
        %v711 = vunpack.c.h.b16 %v700
        %v712 = vunpack.c.l.b16 %v701
        %v713 = vunpack.c.h.b16 %v701
        %v714 = vpack.c.b16 %v706, %v706
        %v715 = vpack.c.b16 %v707, %v707
        %v716 = vpack.c.b16 %v708, %v708
        %v717 = vpack.c.b16 %v709, %v709
        %v718 = vpack.c.b16 %v710, %v710
        %v719 = vpack.c.b16 %v711, %v711
        %v720 = vpack.c.b16 %v712, %v712
        %v721 = vpack.c.b16 %v713, %v713
        %s730 = scalar_lea.vmem %s321, 8
        %731 = vst [vmem:[%s730] sm:$0xf] %v714
        %732 = vst [vmem:[%s730 + $0x4] sm:$0xf] %v715
        %733 = vst [vmem:[%s730 + $0x10] sm:$0xf] %v716
        %734 = vst [vmem:[%s730 + $0x14] sm:$0xf] %v717
        %735 = vst [vmem:[%s730 + $0x20] sm:$0xf] %v718
        %736 = vst [vmem:[%s730 + $0x24] sm:$0xf] %v719
        %737 = vst [vmem:[%s730 + $0x30] sm:$0xf] %v720
        %738 = vst [vmem:[%s730 + $0x34] sm:$0xf] %v721
        %s739 = smul.u32 4, %s26
        %p740 = scmp.lt.s32.totalorder %s25, 1
        %s741 = scalar_select %p740, %s25, 1
        %p742 = scmp.lt.s32.totalorder %s739, 15
        %s743 = scalar_select %p742, %s739, 15
        %s744 = smul.addr %s743, 4
        %s745 = smul.addr %s741, 64
        %s746 = sadd.s32 %s744, %s745
        %s747 = smul.addr %s746, 4
        %s748 = scalar_lea.vmem %s4, %s747
        // Predicated region
        $region49: #{upsample_nhwc.1} parent=35 // pred_check
          %p749 = pneg %p159
        $region50: #{upsample_nhwc.1} parent=35 // pred_check_branch
          %751 = sbr.rel (%p749) target = $region52
        $region51: #{upsample_nhwc.1} parent=35 // pred_region
          %s752 = smul.u32 4, %s26
        $region52: #{upsample_nhwc.1} parent=35 // pred_fallthru
          _
      $region36: #{upsample_nhwc.1} parent=5 // pred_fallthru
        _
      %p753 = scmp.le.s32.totalorder 2, %s16
      // Predicated region
      $region53: #{upsample_nhwc.1} parent=5 // pred_check
        %p754 = pneg %p753
      $region54: #{upsample_nhwc.1} parent=5 // pred_check_branch
        %756 = sbr.rel (%p754) target = $region56
      $region55: #{upsample_nhwc.1} parent=5 // pred_region
        %s757 = ssub.s32 %s16, 2
        // Predicated region
        $region57: #{upsample_nhwc.1} parent=55 // pred_check
          %p758 = pneg %p165
        $region58: #{upsample_nhwc.1} parent=55 // pred_check_branch
          %760 = sbr.rel (%p758) target = $region60
        $region59: #{upsample_nhwc.1} parent=55 // pred_region
          %s761 = smul.u32 4, %s28
          %p762 = scmp.lt.s32.totalorder %s27, 1
          %s763 = scalar_select %p762, %s27, 1
          %p764 = scmp.lt.s32.totalorder %s761, 15
          %s765 = scalar_select %p764, %s761, 15
          %s766 = smul.addr %s765, 4
          %s767 = smul.addr %s763, 64
          %s768 = sadd.s32 %s766, %s767
          %s769 = smul.addr %s768, 4
          %s770 = scalar_lea.vmem %s4, %s769
        $region60: #{upsample_nhwc.1} parent=55 // pred_fallthru
          _
      $region56: #{upsample_nhwc.1} parent=5 // pred_fallthru
        _
    $region6: #{upsample_nhwc.1} parent=1 // loop_footer
      %s20 = sadd.s32 1, %s16
    $region7: #{upsample_nhwc.1} parent=1 // loop_footer_branch
      %15 = sbr.rel target = $region3
    $region8: #{upsample_nhwc.1} parent=1 // loop_exit
      _
    %771 = vsyncpa [#allocation3], 1
    %s772 = scalar_lea.sflag [#allocation3], 1
    %773 = vsyncpa %s772, 1
    %774 = vsyncpa [#allocation5], 1
    %s775 = scalar_lea.sflag [#allocation5], 1
    %776 = vsyncpa %s775, 1

</llo_original>
